<compile_context>
chip_gen: v7x
topology: tpu7x:2x2x1
jax: 0.10.0
libtpu: 0.0.40
codegen_flags: <defaults>
</compile_context>

<pallas_src>
import functools

import jax
import jax.numpy as jnp
from jax.experimental import pallas as pl
from jax.experimental.pallas import tpu as pltpu


def _round_up(x, m):
    return (x + m - 1) // m * m


def _tpu_vmem_capacity_bytes():
    """Physical VMEM per TensorCore; conservative fallback if the query fails."""
    try:
        return int(pltpu.get_tpu_info().vmem_capacity_bytes)
    except Exception:
        return 64 * 1024 * 1024   # v7x-sized fallback (safe on every generation)


def default_hidden_tile():
    """Hidden-dim tile: 1024 on 128 MiB-VMEM parts, 512 on the 64 MiB part."""
    return 1024 if _tpu_vmem_capacity_bytes() >= (96 << 20) else 512


def _vmem_estimate(tm, th, dim, x_bytes, w_bytes, out_bytes):
    """Scoped-VMEM estimate for one grid step (incl. f32 intermediates)."""
    weights = 2 * (dim * 2 * th + th * dim) * w_bytes     # w13 / w2, double-buffered
    acts = 2 * tm * dim * (x_bytes + out_bytes)           # x / out tiles, 2 bufs each
    acc = tm * dim * 4                                     # f32 accumulator scratch
    inter = tm * 2 * th * 4 + tm * th * (4 + w_bytes)      # h (f32) + g (f32 + bf16 copy)
    return int(1.2 * (weights + acts + acc + inter)) + (4 << 20)


def _ffn_kernel(x_ref, w13_ref, w2_ref, o_ref, acc_ref, *, th):
    # x_ref:   (tm, dim)       activation tile (original dtype; cast in-kernel)
    # w13_ref: (dim, 2*th)     [w1 chunk j | w3 chunk j]  (bf16)
    # w2_ref:  (th, dim)       w2 chunk j                 (bf16)
    # o_ref:   (tm, dim)       output tile
    # acc_ref: (tm, dim) f32   accumulator over the hidden (j) axis
    j = pl.program_id(1)

    @pl.when(j == 0)
    def _():
        acc_ref[...] = jnp.zeros_like(acc_ref)

    # Cast to the MXU weight dtype inside the kernel (no wrapper-side HBM pass;
    # the VPU cast co-issues under the MXU).  x block index ignores j, so the
    # tile is DMA'd only once per i.
    xb = x_ref[...].astype(w13_ref.dtype)

    # One MXU matmul producing both branches; f32 accumulation.
    h = jnp.dot(xb, w13_ref[...], preferred_element_type=jnp.float32)
    h1 = h[:, :th]
    h3 = h[:, th:]
    # SiLU gating in f32 (EUP sigmoid + VPU multiplies).
    g = (h1 * jax.nn.sigmoid(h1)) * h3
    # Second GEMM at native (bf16) MXU rate; f32 accumulation.
    acc_ref[...] += jnp.dot(g.astype(w2_ref.dtype), w2_ref[...],
                            preferred_element_type=jnp.float32)

    @pl.when(j == pl.num_programs(1) - 1)
    def _():
        o_ref[...] = acc_ref[...].astype(o_ref.dtype)


def pack_ffn_weights(w1, w3, w2, *, th=1024, dtype=jnp.bfloat16):
    """Pack / pad FFN weights once, outside the hot path.

    w1, w3: (dim, hidden)   (transposed nn.Linear weights, kernel does x @ W)
    w2:     (hidden, dim)

    Returns (w13, w2p, th) where
      w13: (dim, 2*hidden_p)  chunk-interleaved so block j (width 2*th) holds
                              [w1 cols j*th:(j+1)*th | w3 cols j*th:(j+1)*th]
      w2p: (hidden_p, dim)    zero-padded rows
      th:  the (static) hidden tile actually used (multiple of 128)
    """
    dim, hidden = w1.shape
    assert w3.shape == (dim, hidden) and w2.shape == (hidden, dim)
    hidden_128 = _round_up(hidden, 128)
    th = min(_round_up(th, 128), hidden_128)
    hidden_p = _round_up(hidden, th)
    pad_h = hidden_p - hidden

    w1p = jnp.pad(w1, ((0, 0), (0, pad_h))).astype(dtype)
    w3p = jnp.pad(w3, ((0, 0), (0, pad_h))).astype(dtype)
    w2p = jnp.pad(w2, ((0, pad_h), (0, 0))).astype(dtype)

    n_th = hidden_p // th
    w13 = jnp.concatenate(
        [w1p.reshape(dim, n_th, th), w3p.reshape(dim, n_th, th)], axis=2
    ).reshape(dim, 2 * hidden_p)
    return w13, w2p, th


@functools.partial(jax.jit, static_argnames=("th", "tm", "out_dtype"))
def feed_forward_pallas(x, w13, w2, *, th, tm=None, out_dtype=None):
    """x: (..., dim). w13: (dim, 2*hidden_p) packed. w2: (hidden_p, dim)."""
    orig_shape = x.shape
    dim = orig_shape[-1]
    hidden_p = w13.shape[1] // 2
    assert w13.shape[0] == dim and w2.shape == (hidden_p, dim)
    assert hidden_p % th == 0
    out_dtype = jnp.dtype(out_dtype) if out_dtype is not None else x.dtype

    x2d = x.reshape(-1, dim)          # no dtype cast here: done inside the kernel
    m = x2d.shape[0]

    # --- per-generation tiling & VMEM budget -------------------------------
    vmem_cap = _tpu_vmem_capacity_bytes()
    budget = max(vmem_cap - (16 << 20), 32 << 20)      # leave headroom for Mosaic
    if tm is None:
        tm = 1024 if vmem_cap >= (96 << 20) else 512    # v5e/v6e : v7x

    x_bytes = jnp.dtype(x2d.dtype).itemsize
    w_bytes = jnp.dtype(w13.dtype).itemsize
    o_bytes = jnp.dtype(out_dtype).itemsize

    tm_eff = min(tm, _round_up(m, 16))                  # multiple of 16 (bf16 sublanes)
    tm_eff = _round_up(tm_eff, 16)
    while tm_eff > 128 and _vmem_estimate(tm_eff, th, dim, x_bytes, w_bytes,
                                          o_bytes) > budget:
        tm_eff = _round_up(tm_eff // 2, 16)             # shrink tm, never th

    # Pad M only when it is not already tile-aligned (common large-M case: no
    # extra HBM passes at all).
    m_p = _round_up(m, tm_eff)
    if m_p != m:
        x2d = jnp.pad(x2d, ((0, m_p - m), (0, 0)))

    grid = (m_p // tm_eff, hidden_p // th)

    out = pl.pallas_call(
        functools.partial(_ffn_kernel, th=th),
        out_shape=jax.ShapeDtypeStruct((m_p, dim), out_dtype),
        grid_spec=pltpu.PrefetchScalarGridSpec(
            num_scalar_prefetch=0,
            grid=grid,
            in_specs=[
                pl.BlockSpec((tm_eff, dim), lambda i, j: (i, 0)),   # x tile
                pl.BlockSpec((dim, 2 * th), lambda i, j: (0, j)),   # [w1|w3] chunk
                pl.BlockSpec((th, dim), lambda i, j: (j, 0)),       # w2 chunk
            ],
            out_specs=pl.BlockSpec((tm_eff, dim), lambda i, j: (i, 0)),
            scratch_shapes=[pltpu.VMEM((tm_eff, dim), jnp.float32)],
        ),
        compiler_params=pltpu.CompilerParams(
            dimension_semantics=("parallel", "arbitrary"),
            vmem_limit_bytes=int(budget)),
    )(x2d, w13, w2)

    if m_p != m:
        out = out[:m]
    return out.reshape(orig_shape)


def make_params(key, dim, hidden_dim_in, multiple_of, ffn_dim_multiplier=None,
                dtype=jnp.float32):
    # Replicates the hidden_dim arithmetic from FeedForward.__init__.
    hidden_dim = int(2 * hidden_dim_in / 3)
    if ffn_dim_multiplier:
        hidden_dim = int(ffn_dim_multiplier * hidden_dim)
    hidden_dim = multiple_of * ((hidden_dim + multiple_of - 1) // multiple_of)

    k1, k2, k3 = jax.random.split(key, 3)
    # nn.Linear weights are (out, in); stored transposed as (in, out) so the
    # kernel computes x @ W.  Deterministic synthetic init.
    w1 = jax.random.normal(k1, (dim, hidden_dim), dtype) * (1.0 / dim ** 0.5)
    w3 = jax.random.normal(k2, (dim, hidden_dim), dtype) * (1.0 / dim ** 0.5)
    w2 = jax.random.normal(k3, (hidden_dim, dim), dtype) * (1.0 / hidden_dim ** 0.5)
    return w1, w3, w2, hidden_dim


def reference_ffn(x, w1, w3, w2):
    h1 = x @ w1
    h3 = x @ w3
    g = (h1 * jax.nn.sigmoid(h1)) * h3
    return g @ w2


if __name__ == "__main__":
    key = jax.random.PRNGKey(0)
    kx, kp = jax.random.split(key)

    batch, seq, dim = 2, 8, 32
    hidden_dim_arg = 4 * dim      # as passed by TransformerBlock
    multiple_of = 32              # -> hidden = 96 after the 2/3 + rounding rule

    w1, w3, w2, hidden = make_params(kp, dim, hidden_dim_arg, multiple_of)
    x = jax.random.normal(kx, (batch, seq, dim), jnp.float32)

    # Pack/pad weights once (bf16, hidden padded to a multiple of th).
    w13, w2p, th = pack_ffn_weights(w1, w3, w2, th=default_hidden_tile(),
                                    dtype=jnp.bfloat16)

    out = feed_forward_pallas(x, w13, w2p, th=th)
    out = jax.block_until_ready(out)

    # Reference in f32 using the same bf16-rounded weights the kernel saw
    # (x stays f32 in the wrapper; the kernel casts to bf16 on the tile).
    f32 = jnp.float32
    ref = reference_ffn(x.astype(jnp.bfloat16).astype(f32),
                        w1.astype(jnp.bfloat16).astype(f32),
                        w3.astype(jnp.bfloat16).astype(f32),
                        w2.astype(jnp.bfloat16).astype(f32))

    assert out.shape == x.shape
    assert jnp.allclose(out, ref, atol=2e-2, rtol=2e-2), "mismatch vs reference"

    print("KERNEL_OK")
</pallas_src>

<mosaic_0001>
module attributes {stable_mosaic.version = 11 : i64} {
  func.func @_ffn_kernel(%arg0: i32, %arg1: i32, %arg2: memref<16x32xf32, #tpu.memory_space<vmem>>, %arg3: memref<32x256xbf16, #tpu.memory_space<vmem>>, %arg4: memref<128x32xbf16, #tpu.memory_space<vmem>>, %arg5: memref<16x32xf32, #tpu.memory_space<vmem>>, %arg6: memref<16x32xf32, #tpu.memory_space<vmem>>) attributes {dimension_semantics = [#tpu.dimension_semantics<parallel>, #tpu.dimension_semantics<arbitrary>], iteration_bounds = array<i64: 1, 1>, scalar_prefetch = 0 : i64, scratch_operands = 1 : i64, tpu.core_type = #tpu.core_type<tc>, window_params = [{transform_indices = @transform_0, window_bounds = array<i64: 16, 32>}, {transform_indices = @transform_1, window_bounds = array<i64: 32, 256>}, {transform_indices = @transform_2, window_bounds = array<i64: 128, 32>}, {transform_indices = @transform_3, window_bounds = array<i64: 16, 32>}]} {
    %c0_i32 = arith.constant 0 : i32
    %0 = arith.cmpi eq, %arg1, %c0_i32 : i32
    %1 = arith.extui %0 : i1 to i32
    %c0_i32_0 = arith.constant 0 : i32
    %2 = arith.cmpi ne, %1, %c0_i32_0 : i32
    scf.if %2 {
      %cst_14 = arith.constant 0.000000e+00 : f32
      %25 = vector.broadcast %cst_14 : f32 to vector<16x32xf32>
      %c0_15 = arith.constant 0 : index
      %c0_16 = arith.constant 0 : index
      %26 = vector.load %arg6[%c0_15, %c0_16] : memref<16x32xf32, #tpu.memory_space<vmem>>, vector<16x32xf32>
      tpu.vector_store %arg6[%c0_15, %c0_16], %25 {strides = array<i32>} : memref<16x32xf32, #tpu.memory_space<vmem>>, vector<16x32xf32>,
    } else {
    }
    %c0 = arith.constant 0 : index
    %c0_1 = arith.constant 0 : index
    %3 = vector.load %arg2[%c0, %c0_1] : memref<16x32xf32, #tpu.memory_space<vmem>>, vector<16x32xf32>
    %4 = arith.truncf %3 : vector<16x32xf32> to vector<16x32xbf16>
    %c0_2 = arith.constant 0 : index
    %c0_3 = arith.constant 0 : index
    %5 = vector.load %arg3[%c0_2, %c0_3] : memref<32x256xbf16, #tpu.memory_space<vmem>>, vector<32x256xbf16>
    %cst = arith.constant dense<0.000000e+00> : vector<16x256xf32>
    %6 = tpu.matmul %4, %5, %cst {dimension_numbers = #tpu.dot_dimension_numbers<[1], [0], [0], [1], [0, 0, 1, 1], [], []>} : vector<16x32xbf16>, vector<32x256xbf16>, vector<16x256xf32> -> vector<16x256xf32>
    %7 = vector.extract_strided_slice %6 {offsets = [0, 0], sizes = [16, 128], strides = [1, 1]} : vector<16x256xf32> to vector<16x128xf32>
    %8 = vector.extract_strided_slice %6 {offsets = [0, 128], sizes = [16, 128], strides = [1, 1]} : vector<16x256xf32> to vector<16x128xf32>
    %9 = arith.negf %7 : vector<16x128xf32>
    %10 = math.exp %9 : vector<16x128xf32>
    %cst_4 = arith.constant 1.000000e+00 : f32
    %11 = vector.broadcast %cst_4 : f32 to vector<16x128xf32>
    %12 = arith.addf %11, %10 : vector<16x128xf32>
    %13 = arith.divf %11, %12 : vector<16x128xf32>
    %14 = arith.mulf %7, %13 : vector<16x128xf32>
    %15 = arith.mulf %14, %8 : vector<16x128xf32>
    %c0_5 = arith.constant 0 : index
    %c0_6 = arith.constant 0 : index
    %16 = vector.load %arg6[%c0_5, %c0_6] : memref<16x32xf32, #tpu.memory_space<vmem>>, vector<16x32xf32>
    %17 = arith.truncf %15 : vector<16x128xf32> to vector<16x128xbf16>
    %c0_7 = arith.constant 0 : index
    %c0_8 = arith.constant 0 : index
    %18 = vector.load %arg4[%c0_7, %c0_8] : memref<128x32xbf16, #tpu.memory_space<vmem>>, vector<128x32xbf16>
    %cst_9 = arith.constant dense<0.000000e+00> : vector<16x32xf32>
    %19 = tpu.matmul %17, %18, %cst_9 {dimension_numbers = #tpu.dot_dimension_numbers<[1], [0], [0], [1], [0, 0, 1, 1], [], []>} : vector<16x128xbf16>, vector<128x32xbf16>, vector<16x32xf32> -> vector<16x32xf32>
    %20 = arith.addf %16, %19 : vector<16x32xf32>
    %c0_10 = arith.constant 0 : index
    %c0_11 = arith.constant 0 : index
    %21 = vector.load %arg6[%c0_10, %c0_11] : memref<16x32xf32, #tpu.memory_space<vmem>>, vector<16x32xf32>
    tpu.vector_store %arg6[%c0_10, %c0_11], %20 {strides = array<i32>} : memref<16x32xf32, #tpu.memory_space<vmem>>, vector<16x32xf32>,
    %c0_i32_12 = arith.constant 0 : i32
    %22 = arith.cmpi eq, %arg1, %c0_i32_12 : i32
    %23 = arith.extui %22 : i1 to i32
    %c0_i32_13 = arith.constant 0 : i32
    %24 = arith.cmpi ne, %23, %c0_i32_13 : i32
    scf.if %24 {
      %c0_14 = arith.constant 0 : index
      %c0_15 = arith.constant 0 : index
      %25 = vector.load %arg6[%c0_14, %c0_15] : memref<16x32xf32, #tpu.memory_space<vmem>>, vector<16x32xf32>
      %c0_16 = arith.constant 0 : index
      %c0_17 = arith.constant 0 : index
      %26 = vector.load %arg5[%c0_16, %c0_17] : memref<16x32xf32, #tpu.memory_space<vmem>>, vector<16x32xf32>
      tpu.vector_store %arg5[%c0_16, %c0_17], %25 {strides = array<i32>} : memref<16x32xf32, #tpu.memory_space<vmem>>, vector<16x32xf32>,
    } else {
    }
    return
  }
  func.func @transform_0(%arg0: i32, %arg1: i32) -> (i32, i32) {
    %c0_i32 = arith.constant 0 : i32
    %c0_i32_0 = arith.constant 0 : i32
    return %arg0, %c0_i32 : i32, i32
  }
  func.func @transform_1(%arg0: i32, %arg1: i32) -> (i32, i32) {
    %c0_i32 = arith.constant 0 : i32
    %c0_i32_0 = arith.constant 0 : i32
    return %c0_i32, %arg1 : i32, i32
  }
  func.func @transform_2(%arg0: i32, %arg1: i32) -> (i32, i32) {
    %c0_i32 = arith.constant 0 : i32
    %c0_i32_0 = arith.constant 0 : i32
    return %arg1, %c0_i32 : i32, i32
  }
  func.func @transform_3(%arg0: i32, %arg1: i32) -> (i32, i32) {
    %c0_i32 = arith.constant 0 : i32
    %c0_i32_0 = arith.constant 0 : i32
    return %arg0, %c0_i32 : i32, i32
  }
}

</mosaic_0001>

<llo_original>
// kernel: feed_forward_pallas.1
$region0: #{feed_forward_pallas.1}
  #allocation0 [shape = 'u32[]', space=smem, size = 0x4, offset = 0x4, fixed_abs, tag = 'smem constant byte address 0x4 - core index']
  #allocation1 [shape = 'u32[144,128]{1,0:T(1,128)}', space=vmem, size = 0x12000, scoped, tag = 'internal scratch']
  #allocation2 [shape = 'f32[16,32]{1,0:T(8,128)}', space=vmem, size = 0x2000, scoped, tag = 'scratch operand']
  %s0 = inlined_call_operand.vmem [shape: f32[16,32], index: 0, kind: input, shape index: {}]
  %s1 = inlined_call_operand.vmem [shape: bf16[32,256], index: 1, kind: input, shape index: {}]
  %s2 = inlined_call_operand.vmem [shape: bf16[128,32], index: 2, kind: input, shape index: {}]
  %s3 = inlined_call_operand.hbm [shape: f32[16,32], index: 3, kind: output, shape index: {}]
  %s4 = sld [smem:[#allocation0]]
  $region30: #{feed_forward_pallas.1} parent=0
    _
  %s6 = ssub.s32 1, %s4
  %s7 = scalar_select 0, %s6, %s4
  $region1: #{feed_forward_pallas.1} parent=0
    #allocation3 [shape = 'u8[8192]{0}', space=vmem, size = 0x2000, scoped, tag = 'output window, operand 0, single buffered']
    #allocation4 [shape = 's32[1]{0}', space=sflag, size = 0x4, scoped, tag = 'scoped memory for feed_forward_pallas.1']
    %8 = vsyncpa [#allocation4], 0
    // Predicated region
    $region2: #{feed_forward_pallas.1} parent=1 // pred_check
      _
    $region3: #{feed_forward_pallas.1} parent=1 // pred_check_branch
      %10 = sbr.rel (0) target = $region5
    $region4: #{feed_forward_pallas.1} parent=1 // pred_region
      _
    $region5: #{feed_forward_pallas.1} parent=1 // pred_fallthru
      _
    // Predicated region
    $region6: #{feed_forward_pallas.1} parent=1 // pred_check
      _
    $region7: #{feed_forward_pallas.1} parent=1 // pred_check_branch
      %12 = sbr.rel (0) target = $region9
    $region8: #{feed_forward_pallas.1} parent=1 // pred_region
      _
    $region9: #{feed_forward_pallas.1} parent=1 // pred_fallthru
      _
    // Predicated region
    $region10: #{feed_forward_pallas.1} parent=1 // pred_check
      _
    $region11: #{feed_forward_pallas.1} parent=1 // pred_check_branch
      %14 = sbr.rel (0) target = $region13
    $region12: #{feed_forward_pallas.1} parent=1 // pred_region
      _
    $region13: #{feed_forward_pallas.1} parent=1 // pred_fallthru
      _
    %p16 = scmp.eq.s32.totalorder 0, 0
    // Predicated region
    $region14: #{feed_forward_pallas.1} parent=1 // pred_check
      %p17 = pneg %p16
    $region15: #{feed_forward_pallas.1} parent=1 // pred_check_branch
      %19 = sbr.rel (%p17) target = $region17
    $region16: #{feed_forward_pallas.1} parent=1 // pred_region
      %vm20 = vcmask 261120
      %21 = vst.msk [vmem:[#allocation2] sm:$0xff] %vm20, 0.0
      %22 = vst.msk [vmem:[#allocation2 + $0x8] sm:$0xff] %vm20, 0.0
    $region17: #{feed_forward_pallas.1} parent=1 // pred_fallthru
      _
    %v23 = vld [vmem:[%s0] sm:$0xff]
    %v24 = vld [vmem:[%s0 + $0x8] sm:$0xff]
    %v25 = vpack.c.bf16 %v24, %v23
    %v26 = vld [vmem:[%s1] sm:$0xff]
    %v27 = vld [vmem:[%s1 + $0x8] sm:$0xff]
    %v28 = vld [vmem:[%s1 + $0x10] sm:$0xff]
    %v29 = vld [vmem:[%s1 + $0x18] sm:$0xff]
    %v34 = vunpack.c.l.b16 %v26
    %v35 = vunpack.c.h.b16 %v26
    %v36 = vunpack.c.l.b16 %v27
    %v37 = vunpack.c.h.b16 %v27
    %v38 = vunpack.c.l.b16 %v28
    %v39 = vunpack.c.h.b16 %v28
    %v40 = vunpack.c.l.b16 %v29
    %v41 = vunpack.c.h.b16 %v29
    %v42 = vpack.c.b16 %v36, %v34
    %v43 = vpack.c.b16 %v37, %v35
    %v44 = vpack.c.b16 %v40, %v38
    %v45 = vpack.c.b16 %v41, %v39
    %vm50 = vcmask 261120
    %v52 = vsel %vm50, %v25, 0
    %54 = vmatprep.subr.bf16.mxu0 %v43
    %55 = vmatpush1.bf16.msra.mxu0 %v42
    %56 = vmatprep.subr.bf16.mxu0 %v45
    %57 = vmatpush1.bf16.msra.mxu0 %v44
    %58 = vmatprep.subr.bf16.mxu0 0
    %59 = vmatpush1.bf16.msra.mxu0 0
    %60 = vmatprep.subr.bf16.mxu0 0
    %61 = vmatpush1.bf16.msra.mxu0 0
    %62 = vmatprep.subr.bf16.mxu0 0
    %63 = vmatpush1.bf16.msra.mxu0 0
    %64 = vmatprep.subr.bf16.mxu0 0
    %65 = vmatpush1.bf16.msra.mxu0 0
    %66 = vmatprep.subr.bf16.mxu0 0
    %67 = vmatpush1.bf16.msra.mxu0 0
    %68 = vmatprep.subr.bf16.mxu0 0
    %69 = vmatpush1.bf16.msra.mxu0 0
    %70 = vmatprep.subr.bf16.mxu0 0
    %71 = vmatpush1.bf16.msra.mxu0 0
    %72 = vmatprep.subr.bf16.mxu0 0
    %73 = vmatpush1.bf16.msra.mxu0 0
    %74 = vmatprep.subr.bf16.mxu0 0
    %75 = vmatpush1.bf16.msra.mxu0 0
    %76 = vmatprep.subr.bf16.mxu0 0
    %77 = vmatpush1.bf16.msra.mxu0 0
    %78 = vmatprep.subr.bf16.mxu0 0
    %79 = vmatpush1.bf16.msra.mxu0 0
    %80 = vmatprep.subr.bf16.mxu0 0
    %81 = vmatpush1.bf16.msra.mxu0 0
    %82 = vmatprep.subr.bf16.mxu0 0
    %83 = vmatpush1.bf16.msra.mxu0 0
    %84 = vmatprep.subr.bf16.mxu0 0
    %85 = vmatpush1.bf16.msra.mxu0 0
    %86 = vmatprep.mubr.bf16.mxu0 0
    %87 = vmatmul.mubr.bf16.gmra.mrb[0].mxu0 %v52
    %v88 = vpop.f32.mrb[0].mxu0
    %v89 = vadd.f32 0.0, %v88
    %v90 = vpop.f32.mrb[0].mxu0
    %v91 = vadd.f32 0.0, %v90
    %v92 = vpop.f32.mrb[0].mxu0
    %v93 = vadd.f32 0.0, %v92
    %v94 = vpop.f32.mrb[0].mxu0
    %v95 = vadd.f32 0.0, %v94
    %96 = vdwg.mxu0
    %v97 = vxor.u32 %v89, 2147483648
    %v98 = vxor.u32 %v93, 2147483648
    %v99 = vmul.f32 %v97, 1.442695
    %v100 = vpow.pop %v99
    %v101 = vmul.f32 %v98, 1.442695
    %v102 = vpow.pop %v101
    %v103 = vadd.f32 %v100, 1.0
    %v104 = vadd.f32 %v102, 1.0
    %v105 = vrcp.pop %v103
    %v106 = vmul.f32 1.0, %v105
    %v107 = vrcp.pop %v104
    %v108 = vmul.f32 1.0, %v107
    %v109 = vmul.f32 %v89, %v106
    %v110 = vmul.f32 %v93, %v108
    %v111 = vmul.f32 %v109, %v91
    %v112 = vmul.f32 %v110, %v95
    %v113 = vld [vmem:[#allocation2] sm:$0xff]
    %v114 = vld [vmem:[#allocation2 + $0x8] sm:$0xff]
    %v115 = vpack.c.bf16 %v112, %v111
    %v116 = vld [vmem:[%s2] sm:$0xf]
    %v117 = vld [vmem:[%s2 + $0x4] sm:$0xf]
    %v118 = vld [vmem:[%s2 + $0x8] sm:$0xf]
    %v119 = vld [vmem:[%s2 + $0xc] sm:$0xf]
    %v120 = vld [vmem:[%s2 + $0x10] sm:$0xf]
    %v121 = vld [vmem:[%s2 + $0x14] sm:$0xf]
    %v122 = vld [vmem:[%s2 + $0x18] sm:$0xf]
    %v123 = vld [vmem:[%s2 + $0x1c] sm:$0xf]
    %v124 = vld [vmem:[%s2 + $0x20] sm:$0xf]
    %v125 = vld [vmem:[%s2 + $0x24] sm:$0xf]
    %v126 = vld [vmem:[%s2 + $0x28] sm:$0xf]
    %v127 = vld [vmem:[%s2 + $0x2c] sm:$0xf]
    %v128 = vld [vmem:[%s2 + $0x30] sm:$0xf]
    %v129 = vld [vmem:[%s2 + $0x34] sm:$0xf]
    %v130 = vld [vmem:[%s2 + $0x38] sm:$0xf]
    %v131 = vld [vmem:[%s2 + $0x3c] sm:$0xf]
    %v148 = vunpack.c.l.b16 %v116
    %v149 = vunpack.c.l.b16 %v117
    %v150 = vunpack.c.l.b16 %v118
    %v151 = vunpack.c.l.b16 %v119
    %v152 = vunpack.c.l.b16 %v120
    %v153 = vunpack.c.l.b16 %v121
    %v154 = vunpack.c.l.b16 %v122
    %v155 = vunpack.c.l.b16 %v123
    %v156 = vunpack.c.l.b16 %v124
    %v157 = vunpack.c.l.b16 %v125
    %v158 = vunpack.c.l.b16 %v126
    %v159 = vunpack.c.l.b16 %v127
    %v160 = vunpack.c.l.b16 %v128
    %v161 = vunpack.c.l.b16 %v129
    %v162 = vunpack.c.l.b16 %v130
    %v163 = vunpack.c.l.b16 %v131
    %v164 = vpack.c.b16 %v149, %v148
    %v165 = vpack.c.b16 %v151, %v150
    %v166 = vpack.c.b16 %v153, %v152
    %v167 = vpack.c.b16 %v155, %v154
    %v168 = vpack.c.b16 %v157, %v156
    %v169 = vpack.c.b16 %v159, %v158
    %v170 = vpack.c.b16 %v161, %v160
    %v171 = vpack.c.b16 %v163, %v162
    %180 = vmatprep.subr.bf16.mxu0 0
    %181 = vmatpush1.bf16.msra.mxu0 %v164
    %182 = vmatprep.subr.bf16.mxu0 0
    %183 = vmatpush1.bf16.msra.mxu0 %v165
    %184 = vmatprep.subr.bf16.mxu0 0
    %185 = vmatpush1.bf16.msra.mxu0 %v166
    %186 = vmatprep.subr.bf16.mxu0 0
    %187 = vmatpush1.bf16.msra.mxu0 %v167
    %188 = vmatprep.subr.bf16.mxu0 0
    %189 = vmatpush1.bf16.msra.mxu0 %v168
    %190 = vmatprep.subr.bf16.mxu0 0
    %191 = vmatpush1.bf16.msra.mxu0 %v169
    %192 = vmatprep.subr.bf16.mxu0 0
    %193 = vmatpush1.bf16.msra.mxu0 %v170
    %194 = vmatprep.subr.bf16.mxu0 0
    %195 = vmatpush1.bf16.msra.mxu0 %v171
    %196 = vmatprep.subr.bf16.mxu0 0
    %197 = vmatpush1.bf16.msra.mxu0 0
    %198 = vmatprep.subr.bf16.mxu0 0
    %199 = vmatpush1.bf16.msra.mxu0 0
    %200 = vmatprep.subr.bf16.mxu0 0
    %201 = vmatpush1.bf16.msra.mxu0 0
    %202 = vmatprep.subr.bf16.mxu0 0
    %203 = vmatpush1.bf16.msra.mxu0 0
    %204 = vmatprep.subr.bf16.mxu0 0
    %205 = vmatpush1.bf16.msra.mxu0 0
    %206 = vmatprep.subr.bf16.mxu0 0
    %207 = vmatpush1.bf16.msra.mxu0 0
    %208 = vmatprep.subr.bf16.mxu0 0
    %209 = vmatpush1.bf16.msra.mxu0 0
    %210 = vmatprep.subr.bf16.mxu0 0
    %211 = vmatpush1.bf16.msra.mxu0 0
    %212 = vmatprep.mubr.bf16.mxu0 0
    %213 = vmatmul.mubr.bf16.gmra.mrb[0].mxu0 %v115
    %v214 = vpop.f32.mrb[0].mxu0
    %v215 = vadd.f32 0.0, %v214
    %v216 = vpop.f32.mrb[0].mxu0
    %v217 = vpop.f32.mrb[0].mxu0
    %v218 = vadd.f32 0.0, %v217
    %v219 = vpop.f32.mrb[0].mxu0
    %220 = vdwg.mxu0
    %v221 = vadd.f32 %v113, %v215
    %v222 = vadd.f32 %v114, %v218
    %223 = vst.msk [vmem:[#allocation2] sm:$0xff] %vm50, %v221
    %224 = vst.msk [vmem:[#allocation2 + $0x8] sm:$0xff] %vm50, %v222
    // Predicated region
    $region18: #{feed_forward_pallas.1} parent=1 // pred_check
      %p225 = pneg %p16
    $region19: #{feed_forward_pallas.1} parent=1 // pred_check_branch
      %227 = sbr.rel (%p225) target = $region21
    $region20: #{feed_forward_pallas.1} parent=1 // pred_region
      %v228 = vld [vmem:[#allocation2] sm:$0xff]
      %v229 = vld [vmem:[#allocation2 + $0x8] sm:$0xff]
      %230 = vst.msk [vmem:[#allocation3] sm:$0xff] %vm50, %v228
      %231 = vst.msk [vmem:[#allocation3 + $0x8] sm:$0xff] %vm50, %v229
    $region21: #{feed_forward_pallas.1} parent=1 // pred_fallthru
      _
    // Predicated region
    $region22: #{feed_forward_pallas.1} parent=1 // pred_check
      _
    $region23: #{feed_forward_pallas.1} parent=1 // pred_check_branch
      %233 = sbr.rel (0) target = $region25
    $region24: #{feed_forward_pallas.1} parent=1 // pred_region
      %s235 = ssub.s32 256, 256
      %236 = vsyncadd [#allocation4], %s235
      %s237 = sshll.u32 [#allocation3], 4
      %s238 = int_to_ptr.vmem [resolvable:$true] %s237
      %243 = dma.vmem_to_hbm [thread:$0]  %s238, 256, %s3, [#allocation4], 128, 128, 8
    $region25: #{feed_forward_pallas.1} parent=1 // pred_fallthru
      _
    // Predicated region
    $region26: #{feed_forward_pallas.1} parent=1 // pred_check
      _
    $region27: #{feed_forward_pallas.1} parent=1 // pred_check_branch
      %245 = sbr.rel (0) target = $region29
    $region28: #{feed_forward_pallas.1} parent=1 // pred_region
      %246 = dma.done [#allocation4], 256
    $region29: #{feed_forward_pallas.1} parent=1 // pred_fallthru
      _
    %247 = vsyncpa [#allocation4], 1

</llo_original>
